<compile_context>
chip_gen: v7x
topology: tpu7x:2x2x1
jax: 0.10.0
libtpu: 0.0.40
codegen_flags: <defaults>
</compile_context>

<pallas_src>
import functools
import math

import jax
import jax.numpy as jnp
from jax.experimental import pallas as pl
from jax.experimental.pallas import tpu as pltpu

_C1 = math.sqrt(2.0 / math.pi)      # sqrt(2/pi)
_C2 = 0.044715 * _C1                # 0.044715 * sqrt(2/pi)
_LANE = 128


def _gelu_kernel(x_ref, o_ref, *, compute_dtype):
    # Folded-constant tanh GELU: inner = x*(C1 + C2*x^2) == sqrt(2/pi)*(x+0.044715*x^3)
    # y = 0.5*x + 0.5*x*tanh(inner).  tanh runs on the EUP (separate bundle slot),
    # everything else is VPU.  ~7 VALU ops / element.
    x = x_ref[...].astype(compute_dtype)
    x2 = x * x
    inner = x * (_C1 + _C2 * x2)
    half = 0.5 * x
    y = half + half * jnp.tanh(inner)
    o_ref[...] = y.astype(o_ref.dtype)


def _gelu_jnp(x, compute_dtype=jnp.float32):
    """Plain-XLA tanh GELU (same math). Used for the <128-element ragged tail."""
    xf = x.astype(compute_dtype)
    x2 = xf * xf
    inner = xf * (_C1 + _C2 * x2)
    return (0.5 * xf * (1.0 + jnp.tanh(inner))).astype(x.dtype)


def _round_up(a, b):
    return ((a + b - 1) // b) * b


def _pick_tile_rows(rows, row_tile):
    # (8,128) rule: block rows must be a multiple of 8 unless the block spans the
    # whole row extent.
    if rows <= 16:
        return rows  # single full-extent block (tiny input)
    if rows <= 2 * row_tile:
        # Split into >=2 grid steps so v7x's "parallel" axis shards across both
        # TensorCores (a 1-step grid leaves one core idle).  Neutral on v5e/v6e.
        return min(row_tile, _round_up(pl.cdiv(rows, 2), 8))
    return row_tile


def gelu_pallas(x: jax.Array, *, row_tile: int = 8192,
                compute_dtype=jnp.float32) -> jax.Array:
    """Tanh-approx GELU (PyTorch module semantics) as a Pallas TPU kernel.

    row_tile=8192 -> 4 MiB f32 blocks (16 MiB double-buffered in+out), which the
    explicit vmem_limit_bytes=48 MiB admits on v5e/v6e/v7x while amortizing the
    ~0.35 us/grid-step overhead to <10% even at v7x HBM bandwidth.
    On v6e/v7x with bf16 inputs you may pass compute_dtype=jnp.bfloat16 to use the
    native bf16 VALU/EUP path (re-validate numerics); v5e should keep f32.
    """
    orig_shape = x.shape
    n = x.size
    if n == 0:
        return x

    flat = jnp.ravel(x)
    n_main = (n // _LANE) * _LANE

    if n_main == 0:
        # Whole array is smaller than one 128-lane row: a kernel launch is pure
        # overhead, compute it directly.
        return _gelu_jnp(flat, compute_dtype).reshape(orig_shape)

    main = flat if n_main == n else flat[:n_main]
    rows = n_main // _LANE
    slab = main.reshape(rows, _LANE)

    tile_rows = _pick_tile_rows(rows, row_tile)
    grid = (pl.cdiv(rows, tile_rows),)

    itemsize = x.dtype.itemsize
    cost = pl.CostEstimate(
        flops=8 * n_main,
        transcendentals=n_main,
        bytes_accessed=2 * n_main * itemsize,
    )

    out = pl.pallas_call(
        functools.partial(_gelu_kernel, compute_dtype=compute_dtype),
        out_shape=jax.ShapeDtypeStruct((rows, _LANE), x.dtype),
        grid_spec=pltpu.PrefetchScalarGridSpec(
            num_scalar_prefetch=0,
            grid=grid,
            in_specs=[pl.BlockSpec((tile_rows, _LANE), lambda i: (i, 0))],
            out_specs=pl.BlockSpec((tile_rows, _LANE), lambda i: (i, 0)),
        ),
        compiler_params=pltpu.CompilerParams(
            dimension_semantics=("parallel",),
            # 48 MiB: admits the 16-32 MiB double-buffered working set on every
            # generation and leaves 16 MiB headroom under v7x's 64 MiB physical VMEM.
            vmem_limit_bytes=48 * 1024 * 1024,
        ),
        cost_estimate=cost,
    )(slab)

    if n_main == n:
        return out.reshape(orig_shape)
    # Ragged tail (< 128 elements): tiny jnp epilogue instead of a full-array
    # pad + re-slice pass; gelu here is exact, not masked garbage.
    tail = _gelu_jnp(flat[n_main:], compute_dtype)
    return jnp.concatenate([out.reshape(-1), tail]).reshape(orig_shape)


def gelu_ref(x: jax.Array) -> jax.Array:
    # Literal transcription of the PyTorch module (tanh approximation).
    c = jnp.sqrt(jnp.asarray(2.0 / jnp.pi, dtype=jnp.float32)).astype(x.dtype)
    inner = c * (x + 0.044715 * jnp.power(x, 3))
    return 0.5 * x * (1.0 + jnp.tanh(inner))


if __name__ == "__main__":
    key = jax.random.PRNGKey(0)

    # NCHW-like input matching the module's expected use (2048 elems, 128-aligned).
    x = jax.random.normal(key, (2, 4, 16, 16), dtype=jnp.float32)
    y = gelu_pallas(x)
    jax.block_until_ready(y)
    y_ref = gelu_ref(x)
    assert y.shape == x.shape and y.dtype == x.dtype
    assert jnp.allclose(y, y_ref, atol=1e-6, rtol=1e-5), "mismatch vs reference"

    # Ragged shape (150 elems): exercises the Pallas aligned prefix + jnp tail path.
    x2 = jax.random.normal(jax.random.PRNGKey(1), (3, 50), dtype=jnp.float32)
    y2 = gelu_pallas(x2)
    jax.block_until_ready(y2)
    assert y2.shape == x2.shape and y2.dtype == x2.dtype
    assert jnp.allclose(y2, gelu_ref(x2), atol=1e-6, rtol=1e-5), "mismatch (ragged)"

    print("KERNEL_OK")
</pallas_src>

<mosaic_0001>
module attributes {stable_mosaic.version = 11 : i64} {
  func.func @_gelu_kernel(%arg0: i32, %arg1: memref<16x128xf32, #tpu.memory_space<vmem>>, %arg2: memref<16x128xf32, #tpu.memory_space<vmem>>) attributes {dimension_semantics = [#tpu.dimension_semantics<parallel>], iteration_bounds = array<i64: 1>, scalar_prefetch = 0 : i64, scratch_operands = 0 : i64, tpu.core_type = #tpu.core_type<tc>, window_params = [{transform_indices = @transform_0, window_bounds = array<i64: 16, 128>}, {transform_indices = @transform_1, window_bounds = array<i64: 16, 128>}]} {
    %c0 = arith.constant 0 : index
    %c0_0 = arith.constant 0 : index
    %0 = vector.load %arg1[%c0, %c0_0] : memref<16x128xf32, #tpu.memory_space<vmem>>, vector<16x128xf32>
    %1 = arith.mulf %0, %0 : vector<16x128xf32>
    %cst = arith.constant 0.0356774069 : f32
    %2 = vector.broadcast %cst : f32 to vector<16x128xf32>
    %3 = arith.mulf %2, %1 : vector<16x128xf32>
    %cst_1 = arith.constant 0.797884583 : f32
    %4 = vector.broadcast %cst_1 : f32 to vector<16x128xf32>
    %5 = arith.addf %4, %3 : vector<16x128xf32>
    %6 = arith.mulf %0, %5 : vector<16x128xf32>
    %cst_2 = arith.constant 5.000000e-01 : f32
    %7 = vector.broadcast %cst_2 : f32 to vector<16x128xf32>
    %8 = arith.mulf %7, %0 : vector<16x128xf32>
    %9 = math.tanh %6 : vector<16x128xf32>
    %10 = arith.mulf %8, %9 : vector<16x128xf32>
    %11 = arith.addf %8, %10 : vector<16x128xf32>
    %c0_3 = arith.constant 0 : index
    %c0_4 = arith.constant 0 : index
    %12 = vector.load %arg2[%c0_3, %c0_4] : memref<16x128xf32, #tpu.memory_space<vmem>>, vector<16x128xf32>
    tpu.vector_store %arg2[%c0_3, %c0_4], %11 {strides = array<i32>} : memref<16x128xf32, #tpu.memory_space<vmem>>, vector<16x128xf32>,
    return
  }
  func.func @transform_0(%arg0: i32) -> (i32, i32) {
    %c0_i32 = arith.constant 0 : i32
    %c0_i32_0 = arith.constant 0 : i32
    return %arg0, %c0_i32 : i32, i32
  }
  func.func @transform_1(%arg0: i32) -> (i32, i32) {
    %c0_i32 = arith.constant 0 : i32
    %c0_i32_0 = arith.constant 0 : i32
    return %arg0, %c0_i32 : i32, i32
  }
}

</mosaic_0001>

<llo_original>
// kernel: tpu_custom_call.1
$region0: #{tpu_custom_call.1}
  #allocation0 [shape = 'u32[]', space=smem, size = 0x4, offset = 0x4, fixed_abs, tag = 'smem constant byte address 0x4 - core index']
  #allocation1 [shape = 'u32[144,128]{1,0:T(1,128)}', space=vmem, size = 0x12000, scoped, tag = 'internal scratch']
  %s0 = inlined_call_operand.hbm [shape: f32[16,128], index: 0, kind: input, shape index: {}]
  %s1 = inlined_call_operand.hbm [shape: f32[16,128], index: 1, kind: output, shape index: {}]
  %s2 = sld [smem:[#allocation0]]
  $region18: #{tpu_custom_call.1} parent=0
    _
  %s4 = ssub.s32 1, %s2
  %s5 = scalar_select 0, %s4, %s2
  $region1: #{tpu_custom_call.1} parent=0
    #allocation2 [shape = 'u8[8192]{0}', space=vmem, size = 0x2000, scoped, tag = 'input window, operand 0, single buffered']
    #allocation3 [shape = 's32[1]{0}', space=sflag, size = 0x4, scoped, tag = 'scoped memory for tpu_custom_call.1']
    #allocation4 [shape = 's32[1]{0}', space=sflag, size = 0x4, scoped, tag = 'scoped memory for tpu_custom_call.1']
    #allocation5 [shape = 'u8[8192]{0}', space=vmem, size = 0x2000, scoped, tag = 'output window, operand 0, single buffered']
    %6 = vsyncpa [#allocation3], 0
    %7 = vsyncpa [#allocation4], 0
    // Predicated region
    $region2: #{tpu_custom_call.1} parent=1 // pred_check
      _
    $region3: #{tpu_custom_call.1} parent=1 // pred_check_branch
      %9 = sbr.rel (0) target = $region5
    $region4: #{tpu_custom_call.1} parent=1 // pred_region
      %s11 = ssub.s32 256, 256
      %12 = vsyncadd [#allocation3], %s11
      %s13 = sshll.u32 [#allocation2], 4
      %s14 = int_to_ptr.vmem [resolvable:$true] %s13
      %19 = dma.hbm_to_vmem [thread:$0]  %s0, 256, %s14, [#allocation3], 128, 128, 8
    $region5: #{tpu_custom_call.1} parent=1 // pred_fallthru
      _
    // Predicated region
    $region6: #{tpu_custom_call.1} parent=1 // pred_check
      _
    $region7: #{tpu_custom_call.1} parent=1 // pred_check_branch
      %21 = sbr.rel (0) target = $region9
    $region8: #{tpu_custom_call.1} parent=1 // pred_region
      %22 = dma.done [#allocation3], 256
    $region9: #{tpu_custom_call.1} parent=1 // pred_fallthru
      _
    %v23 = vld [vmem:[#allocation2] sm:$0xff]
    %v24 = vld [vmem:[#allocation2 + $0x8] sm:$0xff]
    %v25 = vmul.f32 %v23, %v23
    %v26 = vmul.f32 %v24, %v24
    %v27 = vmul.f32 %v25, 0.035677407
    %v28 = vmul.f32 %v26, 0.035677407
    %v29 = vadd.f32 %v27, 0.7978846
    %v30 = vadd.f32 %v28, 0.7978846
    %v31 = vmul.f32 %v23, %v29
    %v32 = vmul.f32 %v24, %v30
    %v33 = vmul.f32 %v23, 0.5
    %v34 = vmul.f32 %v24, 0.5
    %v35 = vtanh.pop %v31
    %v36 = vtanh.pop %v32
    %v37 = vmul.f32 %v33, %v35
    %v38 = vmul.f32 %v34, %v36
    %v39 = vadd.f32 %v33, %v37
    %v40 = vadd.f32 %v34, %v38
    %41 = vst [vmem:[#allocation5] sm:$0xff] %v39
    %42 = vst [vmem:[#allocation5 + $0x8] sm:$0xff] %v40
    // Predicated region
    $region10: #{tpu_custom_call.1} parent=1 // pred_check
      _
    $region11: #{tpu_custom_call.1} parent=1 // pred_check_branch
      %44 = sbr.rel (0) target = $region13
    $region12: #{tpu_custom_call.1} parent=1 // pred_region
      %s46 = ssub.s32 256, 256
      %47 = vsyncadd [#allocation4], %s46
      %s48 = sshll.u32 [#allocation5], 4
      %s49 = int_to_ptr.vmem [resolvable:$true] %s48
      %54 = dma.vmem_to_hbm [thread:$0]  %s49, 256, %s1, [#allocation4], 128, 128, 8
    $region13: #{tpu_custom_call.1} parent=1 // pred_fallthru
      _
    // Predicated region
    $region14: #{tpu_custom_call.1} parent=1 // pred_check
      _
    $region15: #{tpu_custom_call.1} parent=1 // pred_check_branch
      %56 = sbr.rel (0) target = $region17
    $region16: #{tpu_custom_call.1} parent=1 // pred_region
      %57 = dma.done [#allocation4], 256
    $region17: #{tpu_custom_call.1} parent=1 // pred_fallthru
      _
    %58 = vsyncpa [#allocation3], 1
    %59 = vsyncpa [#allocation4], 1

</llo_original>
